<compile_context>
chip_gen: v6e
topology: v6e:2x2x1
jax: 0.10.0
libtpu: 0.0.40
codegen_flags: <defaults>
</compile_context>

<pallas_src>
import functools

import jax
import jax.numpy as jnp
from jax.experimental import pallas as pl
from jax.experimental.pallas import tpu as pltpu


def _round_up(x: int, m: int) -> int:
    return ((x + m - 1) // m) * m


def _entropy_kernel(x_ref, o_ref, acc_ref, *, n_valid: int, mask_tail: bool):
    """Grid = (num_slices, steps); each step handles one (tm, H) row tile.

    acc_ref: (tm, 1) f32 per-row partial entropy sums, persistent across the
    inner ("arbitrary") step axis; zeroed at step 0, reduced to a scalar and
    written to this slice's output element on the last step.
    """
    c = pl.program_id(0)           # slice index ("parallel" -> megacore on v7x)
    i = pl.program_id(1)           # reduction step within the slice
    steps = pl.num_programs(1)
    tm = x_ref.shape[0]

    @pl.when(i == 0)
    def _():
        acc_ref[...] = jnp.zeros_like(acc_ref)

    x = x_ref[...].astype(jnp.float32)                 # (tm, H)
    m = jnp.max(x, axis=-1, keepdims=True)             # numerically stable softmax
    e = jnp.exp(x - m)
    s = jnp.sum(e, axis=-1, keepdims=True)
    p = e * pl.reciprocal(s, approx=False)             # exact: matches torch softmax
    ent = -p * jnp.log(p + 1e-6)                       # matches torch: -p*log(p+1e-6)

    row_ent = jnp.sum(ent, axis=-1, keepdims=True)     # (tm, 1) per-row entropy
    if mask_tail:
        # Zero contributions from rows that exist only as padding (static check:
        # only emitted when the wrapper actually padded).
        row0 = (c * steps + i) * tm
        rows = row0 + jax.lax.broadcasted_iota(jnp.int32, (tm, 1), 0)
        row_ent = jnp.where(rows < n_valid, row_ent, 0.0)

    acc_ref[...] += row_ent                            # cheap lane-dense VPU add

    @pl.when(i == steps - 1)
    def _():
        o_ref[...] = jnp.reshape(jnp.sum(acc_ref[...]), (1, 1, 1))


_TARGET_BLOCK_BYTES = 4 * 1024 * 1024  # ~4 MiB f32 per input block (fits all gens)


def entropy(logit_p: jax.Array, size_average: bool = True, tm=None) -> jax.Array:
    """JAX/Pallas equivalent of the PyTorch Entropy module's forward."""
    h = logit_p.shape[-1]
    x2 = logit_p.reshape(-1, h)                        # p.view(-1, p.size(-1))
    n = x2.shape[0]

    # --- tile sizing: large blocks, accounting for VMEM lane padding ---
    if tm is None:
        h_lanes = _round_up(h, 128)
        tm = (_TARGET_BLOCK_BYTES // (h_lanes * 4)) // 8 * 8
    tm = max(8, (int(tm) // 8) * 8)
    tm = min(tm, _round_up(n, 8))                      # don't over-allocate for tiny inputs

    # --- grid: leading "parallel" slice axis (megacore on v7x), inner reduction axis ---
    num_blocks = pl.cdiv(n, tm)
    num_slices = 2 if num_blocks >= 2 else 1
    steps = pl.cdiv(num_blocks, num_slices)
    n_pad = num_slices * steps * tm
    if n_pad != n:
        x2 = jnp.pad(x2, ((0, n_pad - n), (0, 0)))     # padded rows are masked in-kernel

    kernel = functools.partial(_entropy_kernel, n_valid=n, mask_tail=(n_pad != n))

    out = pl.pallas_call(
        kernel,
        out_shape=jax.ShapeDtypeStruct((num_slices, 1, 1), jnp.float32),
        grid_spec=pltpu.PrefetchScalarGridSpec(
            num_scalar_prefetch=0,
            grid=(num_slices, steps),
            in_specs=[pl.BlockSpec((tm, h), lambda c, i: (c * steps + i, 0))],
            out_specs=pl.BlockSpec((1, 1, 1), lambda c, i: (c, 0, 0)),
            scratch_shapes=[pltpu.VMEM((tm, 1), jnp.float32)],
        ),
        compiler_params=pltpu.CompilerParams(
            dimension_semantics=("parallel", "arbitrary"),
            vmem_limit_bytes=32 * 1024 * 1024,
        ),
    )(x2)

    result = jnp.sum(out)                              # sum of per-slice partials
    if size_average:
        result = result / n / h                        # entropy / p.size(0) / p.size(1)
    return result


if __name__ == "__main__":
    key = jax.random.PRNGKey(0)

    def ref_entropy(x, size_average=True):
        hh = x.shape[-1]
        p = jax.nn.softmax(x.astype(jnp.float32), axis=-1).reshape(-1, hh)
        ent = jnp.sum(-p * jnp.log(p + 1e-6))
        if size_average:
            ent = ent / p.shape[0] / p.shape[1]
        return ent

    k1, k2, k3 = jax.random.split(key, 3)

    # Test 1: shape consistent with the module usage (batch=2, seq=8, hidden=128).
    x1 = jax.random.normal(k1, (2, 8, 128), dtype=jnp.float32)
    o1 = jax.block_until_ready(entropy(x1, size_average=True))
    r1 = ref_entropy(x1, size_average=True)
    assert jnp.allclose(o1, r1, rtol=1e-5, atol=1e-6), (o1, r1)

    # Test 2: rows not a multiple of 8, hidden not a multiple of 128
    # -> exercises padding + in-kernel tail masking.
    x2 = jax.random.normal(k2, (3, 5, 72), dtype=jnp.float32)
    o2 = jax.block_until_ready(entropy(x2, size_average=False))
    r2 = ref_entropy(x2, size_average=False)
    assert jnp.allclose(o2, r2, rtol=1e-5, atol=1e-5), (o2, r2)

    # Test 3: small tm override -> multi-step reduction, both grid slices, masking.
    x3 = jax.random.normal(k3, (5, 8, 64), dtype=jnp.float32)
    o3 = jax.block_until_ready(entropy(x3, size_average=True, tm=8))
    r3 = ref_entropy(x3, size_average=True)
    assert jnp.allclose(o3, r3, rtol=1e-5, atol=1e-6), (o3, r3)

    print("KERNEL_OK")
</pallas_src>

<mosaic_0001>
module attributes {stable_mosaic.version = 11 : i64} {
  func.func @_entropy_kernel(%arg0: i32, %arg1: i32, %arg2: memref<16x128xf32, #tpu.memory_space<vmem>>, %arg3: memref<1x1x1xf32, #tpu.memory_space<vmem>>, %arg4: memref<16x1xf32, #tpu.memory_space<vmem>>) attributes {dimension_semantics = [#tpu.dimension_semantics<parallel>, #tpu.dimension_semantics<arbitrary>], iteration_bounds = array<i64: 1, 1>, scalar_prefetch = 0 : i64, scratch_operands = 1 : i64, tpu.core_type = #tpu.core_type<tc>, window_params = [{transform_indices = @transform_0, window_bounds = array<i64: 16, 128>}, {transform_indices = @transform_1, window_bounds = array<i64: 1, 1, 1>}]} {
    %c0_i32 = arith.constant 0 : i32
    %0 = arith.cmpi eq, %arg1, %c0_i32 : i32
    %1 = arith.extui %0 : i1 to i32
    %c0_i32_0 = arith.constant 0 : i32
    %2 = arith.cmpi ne, %1, %c0_i32_0 : i32
    scf.if %2 {
      %cst_12 = arith.constant 0.000000e+00 : f32
      %28 = vector.broadcast %cst_12 : f32 to vector<16x1xf32>
      %c0_13 = arith.constant 0 : index
      %c0_14 = arith.constant 0 : index
      %29 = vector.load %arg4[%c0_13, %c0_14] : memref<16x1xf32, #tpu.memory_space<vmem>>, vector<16x1xf32>
      tpu.vector_store %arg4[%c0_13, %c0_14], %28 {strides = array<i32>} : memref<16x1xf32, #tpu.memory_space<vmem>>, vector<16x1xf32>,
    } else {
    }
    %c0 = arith.constant 0 : index
    %c0_1 = arith.constant 0 : index
    %3 = vector.load %arg2[%c0, %c0_1] : memref<16x128xf32, #tpu.memory_space<vmem>>, vector<16x128xf32>
    %cst = arith.constant dense<0xFF800000> : vector<16xf32>
    %4 = vector.multi_reduction <maximumf>, %3, %cst [1] : vector<16x128xf32> to vector<16xf32>
    %5 = vector.shape_cast %4 : vector<16xf32> to vector<16x1xf32>
    %6 = vector.broadcast %5 : vector<16x1xf32> to vector<16x128xf32>
    %7 = arith.subf %3, %6 : vector<16x128xf32>
    %8 = math.exp %7 : vector<16x128xf32>
    %cst_2 = arith.constant dense<0.000000e+00> : vector<16xf32>
    %9 = vector.multi_reduction <add>, %8, %cst_2 [1] : vector<16x128xf32> to vector<16xf32>
    %10 = vector.shape_cast %9 : vector<16xf32> to vector<16x1xf32>
    %11 = tpu.reciprocal %10 : vector<16x1xf32> -> vector<16x1xf32>
    %12 = vector.broadcast %11 : vector<16x1xf32> to vector<16x128xf32>
    %13 = arith.mulf %8, %12 : vector<16x128xf32>
    %cst_3 = arith.constant 0.000000e+00 : f32
    %14 = vector.broadcast %cst_3 : f32 to vector<16x128xf32>
    %15 = arith.subf %14, %13 : vector<16x128xf32>
    %cst_4 = arith.constant 9.99999997E-7 : f32
    %16 = vector.broadcast %cst_4 : f32 to vector<16x128xf32>
    %17 = arith.addf %13, %16 : vector<16x128xf32>
    %18 = math.log %17 : vector<16x128xf32>
    %19 = arith.mulf %15, %18 : vector<16x128xf32>
    %cst_5 = arith.constant dense<0.000000e+00> : vector<16xf32>
    %20 = vector.multi_reduction <add>, %19, %cst_5 [1] : vector<16x128xf32> to vector<16xf32>
    %21 = vector.shape_cast %20 : vector<16xf32> to vector<16x1xf32>
    %c0_6 = arith.constant 0 : index
    %c0_7 = arith.constant 0 : index
    %22 = vector.load %arg4[%c0_6, %c0_7] : memref<16x1xf32, #tpu.memory_space<vmem>>, vector<16x1xf32>
    %23 = arith.addf %22, %21 : vector<16x1xf32>
    %c0_8 = arith.constant 0 : index
    %c0_9 = arith.constant 0 : index
    %24 = vector.load %arg4[%c0_8, %c0_9] : memref<16x1xf32, #tpu.memory_space<vmem>>, vector<16x1xf32>
    tpu.vector_store %arg4[%c0_8, %c0_9], %23 {strides = array<i32>} : memref<16x1xf32, #tpu.memory_space<vmem>>, vector<16x1xf32>,
    %c0_i32_10 = arith.constant 0 : i32
    %25 = arith.cmpi eq, %arg1, %c0_i32_10 : i32
    %26 = arith.extui %25 : i1 to i32
    %c0_i32_11 = arith.constant 0 : i32
    %27 = arith.cmpi ne, %26, %c0_i32_11 : i32
    scf.if %27 {
      %c0_12 = arith.constant 0 : index
      %c0_13 = arith.constant 0 : index
      %28 = vector.load %arg4[%c0_12, %c0_13] : memref<16x1xf32, #tpu.memory_space<vmem>>, vector<16x1xf32>
      %29 = vector.shape_cast %28 : vector<16x1xf32> to vector<1x16x1xf32>
      %cst_14 = arith.constant dense<0.000000e+00> : vector<1xf32>
      %30 = vector.multi_reduction <add>, %29, %cst_14 [1, 2] : vector<1x16x1xf32> to vector<1xf32>
      %31 = vector.shape_cast %30 : vector<1xf32> to vector<1x1x1xf32>
      %32 = vector.extract %31[0, 0, 0] : f32 from vector<1x1x1xf32>
      %33 = vector.broadcast %32 : f32 to vector<1x1x1xf32>
      %c0_15 = arith.constant 0 : index
      %c0_16 = arith.constant 0 : index
      %c0_17 = arith.constant 0 : index
      %34 = vector.load %arg3[%c0_15, %c0_16, %c0_17] : memref<1x1x1xf32, #tpu.memory_space<vmem>>, vector<1x1x1xf32>
      tpu.vector_store %arg3[%c0_15, %c0_16, %c0_17], %33 {strides = array<i32>} : memref<1x1x1xf32, #tpu.memory_space<vmem>>, vector<1x1x1xf32>,
    } else {
    }
    return
  }
  func.func @transform_0(%arg0: i32, %arg1: i32) -> (i32, i32) {
    %c1_i32 = arith.constant 1 : i32
    %0 = arith.muli %arg0, %c1_i32 : i32
    %1 = arith.addi %0, %arg1 : i32
    %c0_i32 = arith.constant 0 : i32
    %c0_i32_0 = arith.constant 0 : i32
    return %1, %c0_i32 : i32, i32
  }
  func.func @transform_1(%arg0: i32, %arg1: i32) -> (i32, i32, i32) {
    %c0_i32 = arith.constant 0 : i32
    %c0_i32_0 = arith.constant 0 : i32
    %c0_i32_1 = arith.constant 0 : i32
    return %arg0, %c0_i32, %c0_i32_0 : i32, i32, i32
  }
}

</mosaic_0001>

<llo_original>
// kernel: tpu_custom_call.1
$region0: #{tpu_custom_call.1}
  #allocation0 [shape = 'u32[]', space=smem, size = 0x4, offset = 0x4, fixed_abs, tag = 'smem constant byte address 0x4 - core index']
  #allocation1 [shape = 'u32[144,128]{1,0:T(1,128)}', space=vmem, size = 0x12000, scoped, tag = 'internal scratch']
  #allocation2 [shape = 'f32[16,1]{1,0:T(8,128)}', space=vmem, size = 0x2000, scoped, tag = 'scratch operand']
  %s0 = inlined_call_operand.hbm [shape: f32[16,128], index: 0, kind: input, shape index: {}]
  %s1 = inlined_call_operand.hbm [shape: f32[1,1,1], index: 1, kind: output, shape index: {}]
  %s2 = sld [smem:[#allocation0]]
  $region26: #{tpu_custom_call.1} parent=0
    _
  %s4 = ssub.s32 1, %s2
  %s5 = scalar_select 0, %s4, %s2
  $region1: #{tpu_custom_call.1} parent=0
    #allocation3 [shape = 'u8[8192]{0}', space=vmem, size = 0x2000, scoped, tag = 'input window, operand 0, single buffered']
    #allocation4 [shape = 's32[1]{0}', space=sflag, size = 0x4, scoped, tag = 'scoped memory for tpu_custom_call.1']
    #allocation5 [shape = 's32[1]{0}', space=sflag, size = 0x4, scoped, tag = 'scoped memory for tpu_custom_call.1']
    #allocation6 [shape = 'u8[512]{0}', space=vmem, size = 0x400, scoped, tag = 'output window, operand 0, single buffered']
    %6 = vsyncpa [#allocation4], 0
    %7 = vsyncpa [#allocation5], 0
    // Predicated region
    $region2: #{tpu_custom_call.1} parent=1 // pred_check
      _
    $region3: #{tpu_custom_call.1} parent=1 // pred_check_branch
      %9 = sbr.rel (0) target = $region5
    $region4: #{tpu_custom_call.1} parent=1 // pred_region
      %s10 = sadd.s32 0, 0
      %s11 = smul.u32 2, %s10
      %s13 = ssub.s32 256, 256
      %14 = vsyncadd [#allocation4], %s13
      %s15 = smul.addr %s11, 128
      %s16 = scalar_lea.hbm %s0, %s15
      %s17 = sshll.u32 [#allocation3], 4
      %s18 = int_to_ptr.vmem [resolvable:$true] %s17
      %23 = dma.hbm_to_vmem [thread:$0]  %s16, 256, %s18, [#allocation4], 128, 128, 8
    $region5: #{tpu_custom_call.1} parent=1 // pred_fallthru
      _
    // Predicated region
    $region6: #{tpu_custom_call.1} parent=1 // pred_check
      _
    $region7: #{tpu_custom_call.1} parent=1 // pred_check_branch
      %25 = sbr.rel (0) target = $region9
    $region8: #{tpu_custom_call.1} parent=1 // pred_region
      %26 = dma.done [#allocation4], 256
    $region9: #{tpu_custom_call.1} parent=1 // pred_fallthru
      _
    %s27 = sadd.s32 0, 0
    %s28 = smul.u32 2, %s27
    %p29 = scmp.eq.s32.totalorder 0, 0
    // Predicated region
    $region10: #{tpu_custom_call.1} parent=1 // pred_check
      %p30 = pneg %p29
    $region11: #{tpu_custom_call.1} parent=1 // pred_check_branch
      %32 = sbr.rel (%p30) target = $region13
    $region12: #{tpu_custom_call.1} parent=1 // pred_region
      %vm33 = vcmask 7168
      %34 = vst.msk [vmem:[#allocation2] sm:$0xff] %vm33, 0.0
      %35 = vst.msk [vmem:[#allocation2 + $0x8] sm:$0xff] %vm33, 0.0
    $region13: #{tpu_custom_call.1} parent=1 // pred_fallthru
      _
    %v36 = vld [vmem:[#allocation3] sm:$0xff]
    %v37 = vld [vmem:[#allocation3 + $0x8] sm:$0xff]
    %38 = vmax.xlane.f32.xlu0 %v36
    %v39 = vpop.xlane.xlu0 %38
    %40 = vmax.xlane.f32.xlu0 %v37
    %v41 = vpop.xlane.xlu0 %40
    %v42 = vsub.f32 %v36, %v39
    %v43 = vsub.f32 %v37, %v41
    %v44 = vmul.f32 %v42, 1.442695
    %v45 = vpow.pop %v44
    %v46 = vmul.f32 %v43, 1.442695
    %v47 = vpow.pop %v46
    %48 = vadd.xlane.f32.xlu0 %v45
    %v49 = vpop.xlane.xlu0 %48
    %50 = vadd.xlane.f32.xlu0 %v47
    %v51 = vpop.xlane.xlu0 %50
    %v52 = vrcp.pop %v49
    %v53 = vrcp.pop %v51
    %v54 = vmul.f32 %v45, %v52
    %v55 = vmul.f32 %v47, %v53
    %v56 = vsub.f32 0.0, %v54
    %v57 = vsub.f32 0.0, %v55
    %v58 = vadd.f32 %v54, 1e-06
    %v59 = vadd.f32 %v55, 1e-06
    %v60 = vlog2.pop %v58
    %v61 = vmul.f32 %v60, 0.6931472
    %v62 = vlog2.pop %v59
    %v63 = vmul.f32 %v62, 0.6931472
    %v64 = vmul.f32 %v56, %v61
    %v65 = vmul.f32 %v57, %v63
    %66 = vadd.xlane.f32.xlu0 %v64
    %v67 = vpop.xlane.xlu0 %66
    %68 = vadd.xlane.f32.xlu0 %v65
    %v69 = vpop.xlane.xlu0 %68
    %v70 = vld [vmem:[#allocation2] sm:$0xff]
    %v71 = vld [vmem:[#allocation2 + $0x8] sm:$0xff]
    %v72 = vadd.f32 %v70, %v67
    %v73 = vadd.f32 %v71, %v69
    %vm74 = vcmask 7168
    %75 = vst.msk [vmem:[#allocation2] sm:$0xff] %vm74, %v72
    %76 = vst.msk [vmem:[#allocation2 + $0x8] sm:$0xff] %vm74, %v73
    // Predicated region
    $region14: #{tpu_custom_call.1} parent=1 // pred_check
      %p77 = pneg %p29
    $region15: #{tpu_custom_call.1} parent=1 // pred_check_branch
      %79 = sbr.rel (%p77) target = $region17
    $region16: #{tpu_custom_call.1} parent=1 // pred_region
      %v80 = vld [vmem:[#allocation2] sm:$0xff]
      %v81 = vld [vmem:[#allocation2 + $0x8] sm:$0xff]
      %v82 = vsel %vm74, %v80, 0.0
      %v83 = vsel %vm74, %v81, 0.0
      %v84 = vadd.f32 %v82, %v83
      %85 = vadd.xlane.f32.xlu0 %v84
      %v86 = vpop.xlane.xlu0 %85
      %v87 = vrot.slane %v86, 4
      %v88 = vadd.f32 %v86, %v87
      %v89 = vrot.slane %v88, 2
      %v90 = vadd.f32 %v88, %v89
      %v91 = vrot.slane %v90, 1
      %v92 = vadd.f32 %v90, %v91
      %s93 = vtos %v92
      %v94 = vstv %s93
      %vm95 = vcmask 0
      %96 = vst.msk [vmem:[#allocation6] sm:$0x1] %vm95, %v94
    $region17: #{tpu_custom_call.1} parent=1 // pred_fallthru
      _
    // Predicated region
    $region18: #{tpu_custom_call.1} parent=1 // pred_check
      _
    $region19: #{tpu_custom_call.1} parent=1 // pred_check_branch
      %98 = sbr.rel (0) target = $region21
    $region20: #{tpu_custom_call.1} parent=1 // pred_region
      %s100 = ssub.s32 16, 16
      %101 = vsyncadd [#allocation5], %s100
      %s103 = sshll.u32 [#allocation6], 4
      %s104 = int_to_ptr.vmem [resolvable:$true] %s103
      %106 = dma.vmem_to_hbm [thread:$0]  %s104, 16, %s1, [#allocation5]
    $region21: #{tpu_custom_call.1} parent=1 // pred_fallthru
      _
    // Predicated region
    $region22: #{tpu_custom_call.1} parent=1 // pred_check
      _
    $region23: #{tpu_custom_call.1} parent=1 // pred_check_branch
      %108 = sbr.rel (0) target = $region25
    $region24: #{tpu_custom_call.1} parent=1 // pred_region
      %109 = dma.done [#allocation5], 16
    $region25: #{tpu_custom_call.1} parent=1 // pred_fallthru
      _
    %110 = vsyncpa [#allocation4], 1
    %111 = vsyncpa [#allocation5], 1

</llo_original>
